<compile_context>
chip_gen: v7x
topology: tpu7x:2x2x1
jax: 0.10.0
libtpu: 0.0.40
codegen_flags: <defaults>
</compile_context>

<pallas_src>
import math
import functools

import jax
import jax.numpy as jnp
from jax.experimental import pallas as pl
from jax.experimental.pallas import tpu as pltpu

_LANE = 128
_TARGET_BLOCK_BYTES = 1 << 20  # ~1 MiB per block -> <= ~8 MiB VMEM with double buffering


def _build_positional_encoding(H: int, d_model: int) -> jnp.ndarray:
    """Deterministic sinusoidal PE table, same math as the PyTorch __init__."""
    position = jnp.arange(0, H, dtype=jnp.float32)[:, None]            # (H, 1)
    div_term = jnp.exp(
        jnp.arange(0, d_model, 2, dtype=jnp.float32)
        * -(math.log(10000.0) / d_model)
    )                                                                   # (d_model//2,)
    pe = jnp.zeros((H, d_model), dtype=jnp.float32)
    pe = pe.at[:, 0::2].set(jnp.sin(position * div_term))
    pe = pe.at[:, 1::2].set(jnp.cos(position * div_term))
    return pe                                                           # (H, d_model)


# ----------------------------- kernels ---------------------------------------


def _pe_add_kernel(x_ref, pe_ref, o_ref):
    # x_ref: (1, tR, C), pe_ref: (tR, C)
    o_ref[...] = (x_ref[...] + pe_ref[...][None, :, :]).astype(o_ref.dtype)


def _pe_add_dropout_kernel(x_ref, pe_ref, bits_ref, o_ref, *, threshold: int,
                           inv_keep: float):
    # x_ref: (1, tR, C), pe_ref: (tR, C), bits_ref: (1, tR, C) uint32
    y = x_ref[...] + pe_ref[...][None, :, :]
    # Integer-threshold inverted dropout: keep with prob (1 - p), scale by 1/(1-p).
    keep = (bits_ref[...] >= jnp.uint32(threshold)).astype(jnp.float32)
    o_ref[...] = (y * (keep * jnp.float32(inv_keep))).astype(o_ref.dtype)


# ----------------------------- wrapper ----------------------------------------


def _pick_row_tile(rows: int, row_bytes: int,
                   target_bytes: int = _TARGET_BLOCK_BYTES) -> int:
    """Largest row tile <= ~target_bytes that satisfies the (8,128) tiling rule."""
    t = max(1, target_bytes // max(1, row_bytes))
    if t >= rows:
        return rows                      # full extent is always legal
    return max(8, (t // 8) * 8)          # multiple of 8 sublanes


def positional_encoder(x: jnp.ndarray,
                       pe: jnp.ndarray,
                       *,
                       dropout_p: float = 0.1,
                       training: bool = True,
                       rng_key=None) -> jnp.ndarray:
    """x: (B, H, d_model); pe: (H, d_model). Returns dropout(x + pe)."""
    B, H, D = x.shape
    assert pe.shape == (H, D)

    use_dropout = bool(training) and dropout_p > 0.0
    if use_dropout and dropout_p >= 1.0:
        return jnp.zeros_like(x)

    # Lane-dense relayout when possible: (B, H, D) -> (B, R, 128) so the output
    # last dim is a full 128-lane multiple (unmasked stores). Otherwise fall back
    # to tiling positions with the native feature dim.
    if (H * D) % _LANE == 0:
        R, C = (H * D) // _LANE, _LANE
        x3 = x.reshape(B, R, C)
        pe3 = pe.reshape(R, C)
    else:
        R, C = H, D
        x3, pe3 = x, pe

    itemsize = jnp.dtype(x.dtype).itemsize
    tR = _pick_row_tile(R, C * itemsize)
    grid = (B, pl.cdiv(R, tR))

    in_specs = [
        pl.BlockSpec((1, tR, C), lambda b, r: (b, r, 0)),   # x tile
        pl.BlockSpec((tR, C),    lambda b, r: (r, 0)),      # pe tile (reused over batch)
    ]
    args = [x3, pe3]

    if use_dropout:
        key = rng_key if rng_key is not None else jax.random.PRNGKey(0)
        # Random bits laid out exactly like x3 -> mask independent of tiling.
        bits = jax.random.bits(key, x3.shape, dtype=jnp.uint32)
        in_specs.append(pl.BlockSpec((1, tR, C), lambda b, r: (b, r, 0)))
        args.append(bits)
        threshold = min((1 << 32) - 1, int(round(dropout_p * float(1 << 32))))
        kernel = functools.partial(_pe_add_dropout_kernel,
                                   threshold=threshold,
                                   inv_keep=1.0 / (1.0 - dropout_p))
    else:
        kernel = _pe_add_kernel

    out = pl.pallas_call(
        kernel,
        out_shape=jax.ShapeDtypeStruct(x3.shape, x.dtype),
        grid=grid,
        in_specs=in_specs,
        out_specs=pl.BlockSpec((1, tR, C), lambda b, r: (b, r, 0)),
        compiler_params=pltpu.CompilerParams(
            # All tiles are independent -> let v7x shard across both TensorCores.
            dimension_semantics=("parallel", "parallel"),
        ),
    )(*args)

    return out.reshape(B, H, D)


# ----------------------------- self-test ---------------------------------------


if __name__ == "__main__":
    B, H, D = 2, 16, 32          # batch=2, positions H=16, d_model=32
    dropout_p = 0.1

    key = jax.random.PRNGKey(0)
    kx, kdrop = jax.random.split(key)
    x = jax.random.normal(kx, (B, H, D), dtype=jnp.float32)
    pe = _build_positional_encoding(H, D)

    # Eval-mode check (dropout is identity): must match pure-JAX reference.
    out_eval = positional_encoder(x, pe, dropout_p=dropout_p, training=False)
    out_eval = jax.block_until_ready(out_eval)
    ref = x + pe[None, :, :]
    assert jnp.allclose(out_eval, ref, atol=1e-6, rtol=1e-6), "eval-mode mismatch"

    # Training-mode run (inverted dropout with precomputed random bits).
    out_train = positional_encoder(x, pe, dropout_p=dropout_p, training=True,
                                   rng_key=kdrop)
    out_train = jax.block_until_ready(out_train)
    assert out_train.shape == (B, H, D)
    # Surviving elements are exactly scaled reference values; dropped ones are 0.
    nonzero = out_train != 0
    scaled_ref = ref / (1.0 - dropout_p)
    assert jnp.allclose(out_train[nonzero], scaled_ref[nonzero],
                        atol=1e-5, rtol=1e-5), "train-mode mismatch"

    print("KERNEL_OK")
</pallas_src>

<mosaic_0001>
module attributes {stable_mosaic.version = 11 : i64} {
  func.func @_pe_add_kernel(%arg0: i32, %arg1: i32, %arg2: memref<1x4x128xf32, #tpu.memory_space<vmem>>, %arg3: memref<4x128xf32, #tpu.memory_space<vmem>>, %arg4: memref<1x4x128xf32, #tpu.memory_space<vmem>>) attributes {dimension_semantics = [#tpu.dimension_semantics<parallel>, #tpu.dimension_semantics<parallel>], iteration_bounds = array<i64: 2, 1>, scalar_prefetch = 0 : i64, scratch_operands = 0 : i64, tpu.core_type = #tpu.core_type<tc>, window_params = [{transform_indices = @transform_0, window_bounds = array<i64: 1, 4, 128>}, {transform_indices = @transform_1, window_bounds = array<i64: 4, 128>}, {transform_indices = @transform_2, window_bounds = array<i64: 1, 4, 128>}]} {
    %c0 = arith.constant 0 : index
    %c0_0 = arith.constant 0 : index
    %c0_1 = arith.constant 0 : index
    %0 = vector.load %arg2[%c0, %c0_0, %c0_1] : memref<1x4x128xf32, #tpu.memory_space<vmem>>, vector<1x4x128xf32>
    %c0_2 = arith.constant 0 : index
    %c0_3 = arith.constant 0 : index
    %1 = vector.load %arg3[%c0_2, %c0_3] : memref<4x128xf32, #tpu.memory_space<vmem>>, vector<4x128xf32>
    %2 = vector.shape_cast %1 : vector<4x128xf32> to vector<1x4x128xf32>
    %3 = arith.addf %0, %2 : vector<1x4x128xf32>
    %c0_4 = arith.constant 0 : index
    %c0_5 = arith.constant 0 : index
    %c0_6 = arith.constant 0 : index
    %4 = vector.load %arg4[%c0_4, %c0_5, %c0_6] : memref<1x4x128xf32, #tpu.memory_space<vmem>>, vector<1x4x128xf32>
    tpu.vector_store %arg4[%c0_4, %c0_5, %c0_6], %3 {strides = array<i32>} : memref<1x4x128xf32, #tpu.memory_space<vmem>>, vector<1x4x128xf32>,
    return
  }
  func.func @transform_0(%arg0: i32, %arg1: i32) -> (i32, i32, i32) {
    %c0_i32 = arith.constant 0 : i32
    %c0_i32_0 = arith.constant 0 : i32
    return %arg0, %arg1, %c0_i32 : i32, i32, i32
  }
  func.func @transform_1(%arg0: i32, %arg1: i32) -> (i32, i32) {
    %c0_i32 = arith.constant 0 : i32
    %c0_i32_0 = arith.constant 0 : i32
    return %arg1, %c0_i32 : i32, i32
  }
  func.func @transform_2(%arg0: i32, %arg1: i32) -> (i32, i32, i32) {
    %c0_i32 = arith.constant 0 : i32
    %c0_i32_0 = arith.constant 0 : i32
    return %arg0, %arg1, %c0_i32 : i32, i32, i32
  }
}

</mosaic_0001>

<llo_original>
// kernel: tpu_custom_call.1
$region0: #{tpu_custom_call.1}
  #allocation0 [shape = 'u32[]', space=smem, size = 0x4, offset = 0x4, fixed_abs, tag = 'smem constant byte address 0x4 - core index']
  #allocation1 [shape = 'u32[144,128]{1,0:T(1,128)}', space=vmem, size = 0x12000, scoped, tag = 'internal scratch']
  %s0 = inlined_call_operand.hbm [shape: f32[2,4,128], index: 0, kind: input, shape index: {}]
  %s1 = inlined_call_operand.hbm [shape: f32[4,128], index: 1, kind: input, shape index: {}]
  %s2 = inlined_call_operand.hbm [shape: f32[2,4,128], index: 2, kind: output, shape index: {}]
  %s3 = sld [smem:[#allocation0]]
  $region49: #{tpu_custom_call.1} parent=0
    _
  %s5 = ssub.s32 1, %s3
  %s6 = scalar_select 0, %s5, %s3
  $region1: #{tpu_custom_call.1} parent=0
    #allocation2 [shape = 'u8[4096]{0}', space=vmem, size = 0x1000, scoped, tag = 'input window, operand 0']
    #allocation3 [shape = 's32[2]{0}', space=sflag, size = 0x8, scoped, tag = 'scoped memory for tpu_custom_call.1']
    #allocation4 [shape = 's32[2]{0}', space=sflag, size = 0x8, scoped, tag = 'scoped memory for tpu_custom_call.1']
    #allocation5 [shape = 'u8[2048]{0}', space=vmem, size = 0x800, scoped, tag = 'input window, operand 1, single buffered']
    #allocation6 [shape = 's32[1]{0}', space=sflag, size = 0x4, scoped, tag = 'scoped memory for tpu_custom_call.1']
    #allocation7 [shape = 'u8[4096]{0}', space=vmem, size = 0x1000, scoped, tag = 'output window, operand 0']
    %7 = vsyncpa [#allocation3], 0
    %s8 = scalar_lea.sflag [#allocation3], 1
    %9 = vsyncpa %s8, 0
    %10 = vsyncpa [#allocation6], 0
    %11 = vsyncpa [#allocation4], 0
    %s12 = scalar_lea.sflag [#allocation4], 1
    %13 = vsyncpa %s12, 0
    loop: start=0, step=1, limit=4
    $region2: #{tpu_custom_call.1} parent=1 // loop_pre_header
      _
    $region3: #{tpu_custom_call.1} parent=1 // loop_header
      %s15 = sphi 0, %s19
      %p16 = scmp.ge.s32.totalorder %s15, 4
      %s22 = sphi 0, %s34
      %s23 = sphi 0, %s30
      %s24 = sphi 0, %s22
      %s25 = sphi 0, %s23
      %s26 = sphi 0, %s24
      %s27 = sphi 0, %s25
      %s39 = sphi 0, %s41
      %s42 = sphi 0, %s39
      %s43 = sphi 0, %s42
      %s59 = sphi 0, %s43
      %s65 = sphi 0, %s67
      %s68 = sphi 0, %s65
      %s69 = sphi 0, %s68
      %s85 = sphi 0, %s69
      %s93 = sphi 0, %s95
      %s96 = sphi 0, %s93
      %s97 = sphi 0, %s96
      %s113 = sphi 0, %s97
    $region4: #{tpu_custom_call.1} parent=1 // loop_header_branch
      %18 = sbr.rel (%p16) target = $region8
    $region5: #{tpu_custom_call.1} parent=1 // loop_body
      %s20 = ssub.s32 %s15, 1
      %s21 = ssub.s32 %s15, 2
      %s28 = sadd.s32 1, %s23
      %p29 = scmp.ge.s32.totalorder %s28, 1
      %s30 = scalar_select %p29, 0, %s28
      %s31 = sadd.s32 1, %s22
      %s32 = scalar_select %p29, %s31, %s22
      %p33 = scmp.ge.s32.totalorder %s32, 2
      %s34 = scalar_select %p33, 0, %s32
      %s35 = ssub.s32 %s22, %s34
      %s36 = ssub.s32 %s23, %s30
      %s37 = sor.u32 %s35, %s36
      %p38 = scmp.eq.s32.totalorder %s37, 0
      %s40 = sadd.s32 %s39, 1
      %s41 = scalar_select %p38, %s39, %s40
      %p44 = pneg %p38
      %p45 = scmp.eq.s32.totalorder %s15, 1
      %p46 = por %p44, %p45
      %p47 = scmp.ne.s32.totalorder %s39, %s42
      %p48 = scmp.eq.s32.totalorder %s15, 0
      %p49 = por %p47, %p48
      %p50 = scmp.ne.s32.totalorder %s39, %s42
      %p51 = scmp.eq.s32.totalorder %s20, 1
      %p52 = por %p50, %p51
      %p53 = scmp.ne.s32.totalorder %s42, %s43
      %p54 = scmp.eq.s32.totalorder %s20, 0
      %p55 = por %p53, %p54
      %p56 = scmp.ne.s32.totalorder %s42, %s43
      %p57 = scmp.eq.s32.totalorder %s21, 1
      %p58 = por %p56, %p57
      %p60 = scmp.ne.s32.totalorder %s43, %s59
      %p61 = scmp.eq.s32.totalorder %s21, 0
      %p62 = por %p60, %p61
      %s63 = ssub.s32 %s23, %s30
      %p64 = scmp.eq.s32.totalorder %s63, 0
      %s66 = sadd.s32 %s65, 1
      %s67 = scalar_select %p64, %s65, %s66
      %p70 = pneg %p64
      %p71 = scmp.eq.s32.totalorder %s15, 1
      %p72 = por %p70, %p71
      %p73 = scmp.ne.s32.totalorder %s65, %s68
      %p74 = scmp.eq.s32.totalorder %s15, 0
      %p75 = por %p73, %p74
      %p76 = scmp.ne.s32.totalorder %s65, %s68
      %p77 = scmp.eq.s32.totalorder %s20, 1
      %p78 = por %p76, %p77
      %p79 = scmp.ne.s32.totalorder %s68, %s69
      %p80 = scmp.eq.s32.totalorder %s20, 0
      %p81 = por %p79, %p80
      %p82 = scmp.ne.s32.totalorder %s68, %s69
      %p83 = scmp.eq.s32.totalorder %s21, 1
      %p84 = por %p82, %p83
      %p86 = scmp.ne.s32.totalorder %s69, %s85
      %p87 = scmp.eq.s32.totalorder %s21, 0
      %p88 = por %p86, %p87
      %s89 = ssub.s32 %s22, %s34
      %s90 = ssub.s32 %s23, %s30
      %s91 = sor.u32 %s89, %s90
      %p92 = scmp.eq.s32.totalorder %s91, 0
      %s94 = sadd.s32 %s93, 1
      %s95 = scalar_select %p92, %s93, %s94
      %p98 = pneg %p92
      %p99 = scmp.eq.s32.totalorder %s15, 1
      %p100 = por %p98, %p99
      %p101 = scmp.ne.s32.totalorder %s93, %s96
      %p102 = scmp.eq.s32.totalorder %s15, 0
      %p103 = por %p101, %p102
      %p104 = scmp.ne.s32.totalorder %s93, %s96
      %p105 = scmp.eq.s32.totalorder %s20, 1
      %p106 = por %p104, %p105
      %p107 = scmp.ne.s32.totalorder %s96, %s97
      %p108 = scmp.eq.s32.totalorder %s20, 0
      %p109 = por %p107, %p108
      %p110 = scmp.ne.s32.totalorder %s96, %s97
      %p111 = scmp.eq.s32.totalorder %s21, 1
      %p112 = por %p110, %p111
      %p114 = scmp.ne.s32.totalorder %s97, %s113
      %p115 = scmp.eq.s32.totalorder %s21, 0
      %p116 = por %p114, %p115
      %p117 = scmp.le.s32.totalorder 1, %s15
      %p118 = scmp.lt.s32.totalorder %s15, 3
      %p119 = pnand %p117, %p118
      %p120 = pneg %p119
      // Predicated region
      $region9: #{tpu_custom_call.1} parent=5 // pred_check
        _
      $region10: #{tpu_custom_call.1} parent=5 // pred_check_branch
        %122 = sbr.rel (%p119) target = $region12
      $region11: #{tpu_custom_call.1} parent=5 // pred_region
        %s123 = ssub.s32 %s15, 1
        // Predicated region
        $region13: #{tpu_custom_call.1} parent=11 // pred_check
          %p124 = pneg %p81
        $region14: #{tpu_custom_call.1} parent=11 // pred_check_branch
          %126 = sbr.rel (%p124) target = $region16
        $region15: #{tpu_custom_call.1} parent=11 // pred_region
          %s128 = ssub.s32 64, 64
          %129 = vsyncadd [#allocation6], %s128
          %s130 = smul.addr %s25, 64
          %s131 = scalar_lea.hbm %s1, %s130
          %s133 = sshll.u32 [#allocation5], 4
          %s134 = int_to_ptr.vmem [resolvable:$true] %s133
          %136 = dma.hbm_to_vmem [thread:$0]  %s131, 64, %s134, [#allocation6]
        $region16: #{tpu_custom_call.1} parent=11 // pred_fallthru
          _
      $region12: #{tpu_custom_call.1} parent=5 // pred_fallthru
        _
      %p137 = scmp.lt.s32.totalorder %s15, 2
      // Predicated region
      $region17: #{tpu_custom_call.1} parent=5 // pred_check
        %p138 = pneg %p137
      $region18: #{tpu_custom_call.1} parent=5 // pred_check_branch
        %140 = sbr.rel (%p138) target = $region20
      $region19: #{tpu_custom_call.1} parent=5 // pred_region
        // Predicated region
        $region21: #{tpu_custom_call.1} parent=19 // pred_check
          %p141 = pneg %p49
        $region22: #{tpu_custom_call.1} parent=19 // pred_check_branch
          %143 = sbr.rel (%p141) target = $region24
        $region23: #{tpu_custom_call.1} parent=19 // pred_region
          %s144 = sand.u32 %s39, 1
          %s145 = scalar_lea.sflag [#allocation3], %s144
          %s146 = sand.u32 %s39, 1
          %s147 = smul.addr %s146, 4
          %s148 = scalar_lea.vmem [#allocation2], %s147
          %s150 = ssub.s32 64, 64
          %151 = vsyncadd %s145, %s150
          %s152 = sadd.s32 %s23, %s22
          %s153 = smul.addr %s152, 64
          %s154 = scalar_lea.hbm %s0, %s153
          %s156 = sshll.u32 %s148, 4
          %s157 = int_to_ptr.vmem [resolvable:$true] %s156
          %159 = dma.hbm_to_vmem [thread:$0]  %s154, 64, %s157, %s145
        $region24: #{tpu_custom_call.1} parent=19 // pred_fallthru
          _
      $region20: #{tpu_custom_call.1} parent=5 // pred_fallthru
        _
      %p160 = scmp.le.s32.totalorder 1, %s15
      %p161 = scmp.lt.s32.totalorder %s15, 3
      %p162 = pnand %p160, %p161
      %p163 = pneg %p162
      // Predicated region
      $region25: #{tpu_custom_call.1} parent=5 // pred_check
        _
      $region26: #{tpu_custom_call.1} parent=5 // pred_check_branch
        %165 = sbr.rel (%p162) target = $region28
      $region27: #{tpu_custom_call.1} parent=5 // pred_region
        %s166 = ssub.s32 %s15, 1
        %s167 = sand.u32 %s42, 1
        %s168 = scalar_lea.sflag [#allocation3], %s167
        %s169 = sand.u32 %s42, 1
        %s170 = smul.addr %s169, 4
        %s171 = scalar_lea.vmem [#allocation2], %s170
        // Predicated region
        $region29: #{tpu_custom_call.1} parent=27 // pred_check
          %p172 = pneg %p55
        $region30: #{tpu_custom_call.1} parent=27 // pred_check_branch
          %174 = sbr.rel (%p172) target = $region32
        $region31: #{tpu_custom_call.1} parent=27 // pred_region
          %175 = dma.done %s168, 64
        $region32: #{tpu_custom_call.1} parent=27 // pred_fallthru
          _
        // Predicated region
        $region33: #{tpu_custom_call.1} parent=27 // pred_check
          %p176 = pneg %p81
        $region34: #{tpu_custom_call.1} parent=27 // pred_check_branch
          %178 = sbr.rel (%p176) target = $region36
        $region35: #{tpu_custom_call.1} parent=27 // pred_region
          %179 = dma.done [#allocation6], 64
        $region36: #{tpu_custom_call.1} parent=27 // pred_fallthru
          _
        %s180 = sand.u32 %s42, 1
        %s181 = scalar_lea.sflag [#allocation3], %s180
        %s182 = sand.u32 %s42, 1
        %s183 = smul.addr %s182, 4
        %s184 = scalar_lea.vmem [#allocation2], %s183
        %p185 = pneg %p55
        %p186 = pneg %p52
        %p187 = pneg %p81
        %p188 = pneg %p78
        %p189 = pneg %p109
        %p190 = pneg %p106
        %s191 = sand.u32 %s96, 1
        %s192 = scalar_lea.sflag [#allocation4], %s191
        %s193 = sand.u32 %s96, 1
        %s194 = smul.addr %s193, 4
        %s195 = scalar_lea.vmem [#allocation7], %s194
        %v196 = vld [vmem:[%s171] sm:$0xf]
        %v197 = vld [vmem:[#allocation5] sm:$0xf]
        %v198 = vadd.f32 %v196, %v197
        %199 = vst [vmem:[%s195] sm:$0xf] %v198
        %s200 = sand.u32 %s96, 1
        %s201 = scalar_lea.sflag [#allocation4], %s200
        %s202 = sand.u32 %s96, 1
        %s203 = smul.addr %s202, 4
        %s204 = scalar_lea.vmem [#allocation7], %s203
        // Predicated region
        $region37: #{tpu_custom_call.1} parent=27 // pred_check
          %p205 = pneg %p106
        $region38: #{tpu_custom_call.1} parent=27 // pred_check_branch
          %207 = sbr.rel (%p205) target = $region40
        $region39: #{tpu_custom_call.1} parent=27 // pred_region
          %s209 = ssub.s32 64, 64
          %210 = vsyncadd %s201, %s209
          %s211 = sadd.s32 %s25, %s24
          %s212 = smul.addr %s211, 64
          %s213 = scalar_lea.hbm %s2, %s212
          %s215 = sshll.u32 %s204, 4
          %s216 = int_to_ptr.vmem [resolvable:$true] %s215
          %218 = dma.vmem_to_hbm [thread:$0]  %s216, 64, %s213, %s201
        $region40: #{tpu_custom_call.1} parent=27 // pred_fallthru
          _
      $region28: #{tpu_custom_call.1} parent=5 // pred_fallthru
        _
      %p219 = scmp.le.s32.totalorder 2, %s15
      // Predicated region
      $region41: #{tpu_custom_call.1} parent=5 // pred_check
        %p220 = pneg %p219
      $region42: #{tpu_custom_call.1} parent=5 // pred_check_branch
        %222 = sbr.rel (%p220) target = $region44
      $region43: #{tpu_custom_call.1} parent=5 // pred_region
        %s223 = ssub.s32 %s15, 2
        // Predicated region
        $region45: #{tpu_custom_call.1} parent=43 // pred_check
          %p224 = pneg %p112
        $region46: #{tpu_custom_call.1} parent=43 // pred_check_branch
          %226 = sbr.rel (%p224) target = $region48
        $region47: #{tpu_custom_call.1} parent=43 // pred_region
          %s227 = sand.u32 %s97, 1
          %s228 = scalar_lea.sflag [#allocation4], %s227
          %s229 = sand.u32 %s97, 1
          %s230 = smul.addr %s229, 4
          %s231 = scalar_lea.vmem [#allocation7], %s230
          %232 = dma.done %s228, 64
        $region48: #{tpu_custom_call.1} parent=43 // pred_fallthru
          _
      $region44: #{tpu_custom_call.1} parent=5 // pred_fallthru
        _
    $region6: #{tpu_custom_call.1} parent=1 // loop_footer
      %s19 = sadd.s32 1, %s15
    $region7: #{tpu_custom_call.1} parent=1 // loop_footer_branch
      %14 = sbr.rel target = $region3
    $region8: #{tpu_custom_call.1} parent=1 // loop_exit
      _
    %233 = vsyncpa [#allocation3], 1
    %s234 = scalar_lea.sflag [#allocation3], 1
    %235 = vsyncpa %s234, 1
    %236 = vsyncpa [#allocation6], 1
    %237 = vsyncpa [#allocation4], 1
    %s238 = scalar_lea.sflag [#allocation4], 1
    %239 = vsyncpa %s238, 1

</llo_original>
